<compile_context>
chip_gen: v7x
topology: tpu7x:2x2x1
jax: 0.10.0
libtpu: 0.0.40
codegen_flags: <defaults>
</compile_context>

<pallas_src>
import functools

import jax
import jax.numpy as jnp
from jax import lax
from jax.experimental import pallas as pl
from jax.experimental.pallas import tpu as pltpu

# ----------------------------- model dims ----------------------------------
NUM_FEATURES = 8
HIDDEN_DIM = 16
OUT_DIM = 8
HEADS = 2
NODES_PER_GRAPH = 8
NUM_GRAPHS = 2
N_NODES = NUM_GRAPHS * NODES_PER_GRAPH

# ------------------------- parameter slab layout ----------------------------
# All matmul operands start on an 8-row (sublane-tile) boundary so the MXU
# sees cleanly aligned operands; the elementwise vectors share one tile.
_ROW_W1 = 0     # [F, H*HID]              rows 0:8
_ROW_A1T = 8    # [H, H*HID] block rows   rows 8:10
_ROW_A1S = 16   # [H, H*HID] block rows   rows 16:18
_ROW_W2 = 24    # [HID, H*OUT]            rows 24:40
_ROW_A2T = 40   # [H, H*OUT] block rows   rows 40:42
_ROW_A2S = 48   # [H, H*OUT] block rows   rows 48:50
_ROW_VEC = 56   # b1 / b2 / gate_w / gate_b, one row each: rows 56..59
_SLAB_ROWS = 64
_SLAB_COLS = 32


# --------------------------- fused kernel body ------------------------------
def _gat_layer(h_in, w, a_t, a_s, bias, neg_bias, *, heads, c, apply_relu):
    """One dense masked-attention GAT layer using only 2-D MXU matmuls."""
    n = h_in.shape[0]
    h = jnp.dot(h_in, w, preferred_element_type=jnp.float32)          # [N, H*C]

    # Per-edge attention logits via two block-structured MXU passes:
    #   target scores with node axis in sublanes ([N, H]),
    #   source scores with node axis in lanes    ([H, N]) -> no transposes.
    dn = (((1,), (1,)), ((), ()))
    at_all = lax.dot_general(h, a_t, dn,
                             preferred_element_type=jnp.float32)      # [N, H]
    as_all = lax.dot_general(a_s, h, dn,
                             preferred_element_type=jnp.float32)      # [H, N]

    acc = jnp.zeros((n, c), jnp.float32)
    for hd in range(heads):                 # tiny static loop (heads == 2)
        e = at_all[:, hd:hd + 1] + as_all[hd:hd + 1, :]               # [N, N]
        e = jnp.where(e > 0.0, e, 0.2 * e)                            # leaky_relu(0.2)
        e = e + neg_bias                                              # additive edge mask
        m = jnp.max(e, axis=-1, keepdims=True)
        p = jnp.exp(e - m)
        alpha = p / jnp.sum(p, axis=-1, keepdims=True)                # exact softmax
        acc = acc + jnp.dot(alpha, h[:, hd * c:(hd + 1) * c],
                            preferred_element_type=jnp.float32)       # [N, C]

    out = acc * (1.0 / float(heads)) + bias                           # mean over heads + bias
    if apply_relu:
        out = jnp.maximum(out, 0.0)
    return out


def _graph_encoder_kernel(x_ref, adj_ref, p_ref, out_ref, *,
                          heads, hidden_dim, out_dim,
                          nodes_per_graph, num_graphs):
    f = x_ref.shape[1]

    # Additive edge mask, computed ONCE and reused by both layers.
    neg_bias = jnp.where(adj_ref[...] > 0.5, 0.0, -1e30)              # [N, N] f32

    # Static slices of the packed parameter slab (one DMA'd input).
    w1 = p_ref[_ROW_W1:_ROW_W1 + f, 0:heads * hidden_dim]
    a1_t = p_ref[_ROW_A1T:_ROW_A1T + heads, 0:heads * hidden_dim]
    a1_s = p_ref[_ROW_A1S:_ROW_A1S + heads, 0:heads * hidden_dim]
    w2 = p_ref[_ROW_W2:_ROW_W2 + hidden_dim, 0:heads * out_dim]
    a2_t = p_ref[_ROW_A2T:_ROW_A2T + heads, 0:heads * out_dim]
    a2_s = p_ref[_ROW_A2S:_ROW_A2S + heads, 0:heads * out_dim]
    b1 = p_ref[_ROW_VEC + 0:_ROW_VEC + 1, 0:hidden_dim]
    b2 = p_ref[_ROW_VEC + 1:_ROW_VEC + 2, 0:out_dim]
    gate_w = p_ref[_ROW_VEC + 2:_ROW_VEC + 3, 0:out_dim]
    gate_b = p_ref[_ROW_VEC + 3:_ROW_VEC + 4, 0:1]

    # GAT layer 1 + ReLU
    h1 = _gat_layer(x_ref[...], w1, a1_t, a1_s, b1, neg_bias,
                    heads=heads, c=hidden_dim, apply_relu=True)
    # TODO(synk): F.dropout(training=True) is stochastic; reproduced as identity (eval mode).
    # GAT layer 2
    emb = _gat_layer(h1, w2, a2_t, a2_s, b2, neg_bias,
                     heads=heads, c=out_dim, apply_relu=False)

    # Gated readout.
    gates = jax.nn.sigmoid(
        jnp.sum(emb * gate_w, axis=-1, keepdims=True) + gate_b)       # [N, 1]
    gated = emb * gates                                               # [N, D]

    # Contiguous, equal-size graphs; nodes_per_graph == 8 aligns with the
    # sublane tile so this lowers to clean sublane reduces.
    # TODO(synk): ragged batches would need segment pooling instead.
    pooled = jnp.sum(gated.reshape(num_graphs, nodes_per_graph, out_dim), axis=1)  # [G, D]
    norm = jnp.sum(gates.reshape(num_graphs, nodes_per_graph, 1), axis=1)          # [G, 1]
    norm = jnp.maximum(norm, 1e-6)
    out_ref[...] = (pooled / norm).astype(out_ref.dtype)


# --------------------------- host-side param packing -------------------------
def _block_rows(att, heads, c):
    """att [H, C] -> [H, H*C] with att[h] placed in columns h*C:(h+1)*C."""
    out = jnp.zeros((heads, heads * c), jnp.float32)
    for hd in range(heads):
        out = out.at[hd, hd * c:(hd + 1) * c].set(att[hd])
    return out


def pack_params(params, *, heads=HEADS, hidden_dim=HIDDEN_DIM, out_dim=OUT_DIM):
    slab = jnp.zeros((_SLAB_ROWS, _SLAB_COLS), jnp.float32)

    def put(s, row, a):
        a = jnp.asarray(a, jnp.float32)
        return s.at[row:row + a.shape[0], 0:a.shape[1]].set(a)

    slab = put(slab, _ROW_W1, params["gat1_w"])
    slab = put(slab, _ROW_A1T, _block_rows(params["gat1_att_t"], heads, hidden_dim))
    slab = put(slab, _ROW_A1S, _block_rows(params["gat1_att_s"], heads, hidden_dim))
    slab = put(slab, _ROW_W2, params["gat2_w"])
    slab = put(slab, _ROW_A2T, _block_rows(params["gat2_att_t"], heads, out_dim))
    slab = put(slab, _ROW_A2S, _block_rows(params["gat2_att_s"], heads, out_dim))
    slab = put(slab, _ROW_VEC + 0, params["gat1_bias"].reshape(1, hidden_dim))
    slab = put(slab, _ROW_VEC + 1, params["gat2_bias"].reshape(1, out_dim))
    slab = put(slab, _ROW_VEC + 2, params["gate_w"].reshape(1, out_dim))
    slab = put(slab, _ROW_VEC + 3, params["gate_b"].reshape(1, 1))
    return slab


# ------------------------------ wrapper --------------------------------------
def graph_encoder_forward(params, x, adj, *, heads=HEADS, hidden_dim=HIDDEN_DIM,
                          out_dim=OUT_DIM, nodes_per_graph=NODES_PER_GRAPH,
                          num_graphs=NUM_GRAPHS):
    slab = pack_params(params, heads=heads, hidden_dim=hidden_dim, out_dim=out_dim)
    kernel = functools.partial(
        _graph_encoder_kernel, heads=heads, hidden_dim=hidden_dim, out_dim=out_dim,
        nodes_per_graph=nodes_per_graph, num_graphs=num_graphs)

    # No grid (single-shot kernel) and whole-array VMEM residency: avoids the
    # size-1 grid's double-buffering + pipeline prologue/epilogue entirely.
    vmem = pl.BlockSpec(memory_space=pltpu.MemorySpace.VMEM)
    graph_emb = pl.pallas_call(
        kernel,
        out_shape=jax.ShapeDtypeStruct((num_graphs, out_dim), jnp.float32),
        in_specs=[vmem, vmem, vmem],
        out_specs=vmem,
    )(x.astype(jnp.float32), adj.astype(jnp.float32), slab)

    # torch .squeeze(0): only squeezes if there is a single graph
    return graph_emb[0] if graph_emb.shape[0] == 1 else graph_emb


# ---------------------------- parameter init ---------------------------------
def _xavier_uniform(key, shape, fan_in, fan_out):
    limit = (6.0 / (fan_in + fan_out)) ** 0.5
    return jax.random.uniform(key, shape, jnp.float32, -limit, limit)


def init_params(key):
    ks = jax.random.split(key, 8)
    p = {}
    # gat1: Linear(num_features -> heads*hidden), stored as [F, heads*C] for x @ W
    p["gat1_w"] = _xavier_uniform(ks[0], (NUM_FEATURES, HEADS * HIDDEN_DIM),
                                  NUM_FEATURES, HEADS * HIDDEN_DIM)
    p["gat1_att_t"] = _xavier_uniform(ks[1], (HEADS, HIDDEN_DIM), HEADS, HIDDEN_DIM)
    p["gat1_att_s"] = _xavier_uniform(ks[2], (HEADS, HIDDEN_DIM), HEADS, HIDDEN_DIM)
    p["gat1_bias"] = jnp.zeros((1, HIDDEN_DIM), jnp.float32)
    # gat2: Linear(hidden -> heads*out_dim)
    p["gat2_w"] = _xavier_uniform(ks[3], (HIDDEN_DIM, HEADS * OUT_DIM),
                                  HIDDEN_DIM, HEADS * OUT_DIM)
    p["gat2_att_t"] = _xavier_uniform(ks[4], (HEADS, OUT_DIM), HEADS, OUT_DIM)
    p["gat2_att_s"] = _xavier_uniform(ks[5], (HEADS, OUT_DIM), HEADS, OUT_DIM)
    p["gat2_bias"] = jnp.zeros((1, OUT_DIM), jnp.float32)
    # gate: Linear(out_dim -> 1); weight stored as a [1, out_dim] row vector
    p["gate_w"] = _xavier_uniform(ks[6], (1, OUT_DIM), OUT_DIM, 1)
    p["gate_b"] = jax.random.uniform(ks[7], (1, 1), jnp.float32, -0.1, 0.1)
    return p


# ------------------------------ example graph --------------------------------
def build_graph():
    # Two graphs of 8 nodes each; bidirectional ring edges inside each graph.
    src, dst = [], []
    for g in range(NUM_GRAPHS):
        base = g * NODES_PER_GRAPH
        for i in range(NODES_PER_GRAPH):
            s = base + i
            t = base + (i + 1) % NODES_PER_GRAPH
            src += [s, t]
            dst += [t, s]
    adj = jnp.zeros((N_NODES, N_NODES), jnp.float32)
    adj = adj.at[jnp.array(dst), jnp.array(src)].set(1.0)      # adj[target, source]
    adj = adj + jnp.eye(N_NODES, dtype=jnp.float32)            # add_self_loops
    return adj


if __name__ == "__main__":
    key = jax.random.PRNGKey(0)
    k_param, k_x = jax.random.split(key)
    params = init_params(k_param)
    x = jax.random.normal(k_x, (N_NODES, NUM_FEATURES), jnp.float32)
    adj = build_graph()

    graph_emb = graph_encoder_forward(params, x, adj)
    graph_emb = jax.block_until_ready(graph_emb)

    assert graph_emb.shape == (NUM_GRAPHS, OUT_DIM), graph_emb.shape
    assert bool(jnp.all(jnp.isfinite(graph_emb)))
    print("KERNEL_OK")
</pallas_src>

<mosaic_0001>
module attributes {stable_mosaic.version = 11 : i64} {
  func.func @_graph_encoder_kernel(%arg0: memref<16x8xf32, #tpu.memory_space<vmem>>, %arg1: memref<16x16xf32, #tpu.memory_space<vmem>>, %arg2: memref<64x32xf32, #tpu.memory_space<vmem>>, %arg3: memref<2x8xf32, #tpu.memory_space<vmem>>) attributes {dimension_semantics = [], scalar_prefetch = 0 : i64, scratch_operands = 0 : i64, tpu.core_type = #tpu.core_type<tc>} {
    %c0 = arith.constant 0 : index
    %c0_0 = arith.constant 0 : index
    %0 = vector.load %arg1[%c0, %c0_0] : memref<16x16xf32, #tpu.memory_space<vmem>>, vector<16x16xf32>
    %cst = arith.constant 5.000000e-01 : f32
    %1 = vector.broadcast %cst : f32 to vector<16x16xf32>
    %2 = arith.cmpf ogt, %0, %1 : vector<16x16xf32>
    %cst_1 = arith.constant 0.000000e+00 : f32
    %cst_2 = arith.constant -1.000000e+30 : f32
    %3 = vector.broadcast %cst_1 : f32 to vector<16x16xf32>
    %4 = vector.broadcast %cst_2 : f32 to vector<16x16xf32>
    %5 = arith.select %2, %3, %4 : vector<16x16xi1>, vector<16x16xf32>
    %c0_3 = arith.constant 0 : index
    %c0_4 = arith.constant 0 : index
    %6 = vector.load %arg2[%c0_3, %c0_4] : memref<64x32xf32, #tpu.memory_space<vmem>>, vector<8x32xf32>
    %c8 = arith.constant 8 : index
    %c0_5 = arith.constant 0 : index
    %7 = vector.load %arg2[%c8, %c0_5] : memref<64x32xf32, #tpu.memory_space<vmem>>, vector<2x32xf32>
    %c16 = arith.constant 16 : index
    %c0_6 = arith.constant 0 : index
    %8 = vector.load %arg2[%c16, %c0_6] : memref<64x32xf32, #tpu.memory_space<vmem>>, vector<2x32xf32>
    %c24 = arith.constant 24 : index
    %c0_7 = arith.constant 0 : index
    %9 = vector.load %arg2[%c24, %c0_7] : memref<64x32xf32, #tpu.memory_space<vmem>>, vector<16x16xf32>
    %c40 = arith.constant 40 : index
    %c0_8 = arith.constant 0 : index
    %10 = vector.load %arg2[%c40, %c0_8] : memref<64x32xf32, #tpu.memory_space<vmem>>, vector<2x16xf32>
    %c48 = arith.constant 48 : index
    %c0_9 = arith.constant 0 : index
    %11 = vector.load %arg2[%c48, %c0_9] : memref<64x32xf32, #tpu.memory_space<vmem>>, vector<2x16xf32>
    %c56 = arith.constant 56 : index
    %c0_10 = arith.constant 0 : index
    %12 = vector.load %arg2[%c56, %c0_10] : memref<64x32xf32, #tpu.memory_space<vmem>>, vector<1x16xf32>
    %c57 = arith.constant 57 : index
    %c0_11 = arith.constant 0 : index
    %13 = vector.load %arg2[%c57, %c0_11] : memref<64x32xf32, #tpu.memory_space<vmem>>, vector<1x8xf32>
    %c58 = arith.constant 58 : index
    %c0_12 = arith.constant 0 : index
    %14 = vector.load %arg2[%c58, %c0_12] : memref<64x32xf32, #tpu.memory_space<vmem>>, vector<1x8xf32>
    %c59 = arith.constant 59 : index
    %c0_13 = arith.constant 0 : index
    %15 = vector.load %arg2[%c59, %c0_13] : memref<64x32xf32, #tpu.memory_space<vmem>>, vector<1x1xf32>
    %c0_14 = arith.constant 0 : index
    %c0_15 = arith.constant 0 : index
    %16 = vector.load %arg0[%c0_14, %c0_15] : memref<16x8xf32, #tpu.memory_space<vmem>>, vector<16x8xf32>
    %cst_16 = arith.constant dense<0.000000e+00> : vector<16x32xf32>
    %17 = tpu.matmul %16, %6, %cst_16 {dimension_numbers = #tpu.dot_dimension_numbers<[1], [0], [0], [1], [0, 0, 1, 1], [], []>} : vector<16x8xf32>, vector<8x32xf32>, vector<16x32xf32> -> vector<16x32xf32>
    %cst_17 = arith.constant dense<0.000000e+00> : vector<16x2xf32>
    %18 = tpu.matmul %17, %7, %cst_17 {dimension_numbers = #tpu.dot_dimension_numbers<[1], [1], [0], [0], [0, 0, 1, 0], [], []>} : vector<16x32xf32>, vector<2x32xf32>, vector<16x2xf32> -> vector<16x2xf32>
    %cst_18 = arith.constant dense<0.000000e+00> : vector<2x16xf32>
    %19 = tpu.matmul %8, %17, %cst_18 {dimension_numbers = #tpu.dot_dimension_numbers<[1], [1], [0], [0], [0, 0, 1, 0], [], []>} : vector<2x32xf32>, vector<16x32xf32>, vector<2x16xf32> -> vector<2x16xf32>
    %cst_19 = arith.constant 0.000000e+00 : f32
    %20 = vector.broadcast %cst_19 : f32 to vector<16x16xf32>
    %21 = vector.extract_strided_slice %18 {offsets = [0, 0], sizes = [16, 1], strides = [1, 1]} : vector<16x2xf32> to vector<16x1xf32>
    %22 = vector.extract_strided_slice %19 {offsets = [0, 0], sizes = [1, 16], strides = [1, 1]} : vector<2x16xf32> to vector<1x16xf32>
    %23 = vector.broadcast %21 : vector<16x1xf32> to vector<16x16xf32>
    %24 = vector.broadcast %22 : vector<1x16xf32> to vector<16x16xf32>
    %25 = arith.addf %23, %24 : vector<16x16xf32>
    %cst_20 = arith.constant 0.000000e+00 : f32
    %26 = vector.broadcast %cst_20 : f32 to vector<16x16xf32>
    %27 = arith.cmpf ogt, %25, %26 : vector<16x16xf32>
    %cst_21 = arith.constant 2.000000e-01 : f32
    %28 = vector.broadcast %cst_21 : f32 to vector<16x16xf32>
    %29 = arith.mulf %28, %25 : vector<16x16xf32>
    %30 = arith.select %27, %25, %29 : vector<16x16xi1>, vector<16x16xf32>
    %31 = arith.addf %30, %5 : vector<16x16xf32>
    %cst_22 = arith.constant dense<0xFF800000> : vector<16xf32>
    %32 = vector.multi_reduction <maximumf>, %31, %cst_22 [1] : vector<16x16xf32> to vector<16xf32>
    %33 = vector.shape_cast %32 : vector<16xf32> to vector<16x1xf32>
    %34 = vector.broadcast %33 : vector<16x1xf32> to vector<16x16xf32>
    %35 = arith.subf %31, %34 : vector<16x16xf32>
    %36 = math.exp %35 : vector<16x16xf32>
    %cst_23 = arith.constant dense<0.000000e+00> : vector<16xf32>
    %37 = vector.multi_reduction <add>, %36, %cst_23 [1] : vector<16x16xf32> to vector<16xf32>
    %38 = vector.shape_cast %37 : vector<16xf32> to vector<16x1xf32>
    %39 = vector.broadcast %38 : vector<16x1xf32> to vector<16x16xf32>
    %40 = arith.divf %36, %39 : vector<16x16xf32>
    %41 = vector.extract_strided_slice %17 {offsets = [0, 0], sizes = [16, 16], strides = [1, 1]} : vector<16x32xf32> to vector<16x16xf32>
    %cst_24 = arith.constant dense<0.000000e+00> : vector<16x16xf32>
    %42 = tpu.matmul %40, %41, %cst_24 {dimension_numbers = #tpu.dot_dimension_numbers<[1], [0], [0], [1], [0, 0, 1, 1], [], []>} : vector<16x16xf32>, vector<16x16xf32>, vector<16x16xf32> -> vector<16x16xf32>
    %43 = arith.addf %20, %42 : vector<16x16xf32>
    %44 = vector.extract_strided_slice %18 {offsets = [0, 1], sizes = [16, 1], strides = [1, 1]} : vector<16x2xf32> to vector<16x1xf32>
    %45 = vector.extract_strided_slice %19 {offsets = [1, 0], sizes = [1, 16], strides = [1, 1]} : vector<2x16xf32> to vector<1x16xf32>
    %46 = vector.broadcast %44 : vector<16x1xf32> to vector<16x16xf32>
    %47 = vector.broadcast %45 : vector<1x16xf32> to vector<16x16xf32>
    %48 = arith.addf %46, %47 : vector<16x16xf32>
    %cst_25 = arith.constant 0.000000e+00 : f32
    %49 = vector.broadcast %cst_25 : f32 to vector<16x16xf32>
    %50 = arith.cmpf ogt, %48, %49 : vector<16x16xf32>
    %cst_26 = arith.constant 2.000000e-01 : f32
    %51 = vector.broadcast %cst_26 : f32 to vector<16x16xf32>
    %52 = arith.mulf %51, %48 : vector<16x16xf32>
    %53 = arith.select %50, %48, %52 : vector<16x16xi1>, vector<16x16xf32>
    %54 = arith.addf %53, %5 : vector<16x16xf32>
    %cst_27 = arith.constant dense<0xFF800000> : vector<16xf32>
    %55 = vector.multi_reduction <maximumf>, %54, %cst_27 [1] : vector<16x16xf32> to vector<16xf32>
    %56 = vector.shape_cast %55 : vector<16xf32> to vector<16x1xf32>
    %57 = vector.broadcast %56 : vector<16x1xf32> to vector<16x16xf32>
    %58 = arith.subf %54, %57 : vector<16x16xf32>
    %59 = math.exp %58 : vector<16x16xf32>
    %cst_28 = arith.constant dense<0.000000e+00> : vector<16xf32>
    %60 = vector.multi_reduction <add>, %59, %cst_28 [1] : vector<16x16xf32> to vector<16xf32>
    %61 = vector.shape_cast %60 : vector<16xf32> to vector<16x1xf32>
    %62 = vector.broadcast %61 : vector<16x1xf32> to vector<16x16xf32>
    %63 = arith.divf %59, %62 : vector<16x16xf32>
    %64 = vector.extract_strided_slice %17 {offsets = [0, 16], sizes = [16, 16], strides = [1, 1]} : vector<16x32xf32> to vector<16x16xf32>
    %cst_29 = arith.constant dense<0.000000e+00> : vector<16x16xf32>
    %65 = tpu.matmul %63, %64, %cst_29 {dimension_numbers = #tpu.dot_dimension_numbers<[1], [0], [0], [1], [0, 0, 1, 1], [], []>} : vector<16x16xf32>, vector<16x16xf32>, vector<16x16xf32> -> vector<16x16xf32>
    %66 = arith.addf %43, %65 : vector<16x16xf32>
    %cst_30 = arith.constant 5.000000e-01 : f32
    %67 = vector.broadcast %cst_30 : f32 to vector<16x16xf32>
    %68 = arith.mulf %66, %67 : vector<16x16xf32>
    %69 = vector.broadcast %12 : vector<1x16xf32> to vector<16x16xf32>
    %70 = arith.addf %68, %69 : vector<16x16xf32>
    %cst_31 = arith.constant 0.000000e+00 : f32
    %71 = vector.broadcast %cst_31 : f32 to vector<16x16xf32>
    %72 = arith.maximumf %70, %71 : vector<16x16xf32>
    %cst_32 = arith.constant dense<0.000000e+00> : vector<16x16xf32>
    %73 = tpu.matmul %72, %9, %cst_32 {dimension_numbers = #tpu.dot_dimension_numbers<[1], [0], [0], [1], [0, 0, 1, 1], [], []>} : vector<16x16xf32>, vector<16x16xf32>, vector<16x16xf32> -> vector<16x16xf32>
    %cst_33 = arith.constant dense<0.000000e+00> : vector<16x2xf32>
    %74 = tpu.matmul %73, %10, %cst_33 {dimension_numbers = #tpu.dot_dimension_numbers<[1], [1], [0], [0], [0, 0, 1, 0], [], []>} : vector<16x16xf32>, vector<2x16xf32>, vector<16x2xf32> -> vector<16x2xf32>
    %cst_34 = arith.constant dense<0.000000e+00> : vector<2x16xf32>
    %75 = tpu.matmul %11, %73, %cst_34 {dimension_numbers = #tpu.dot_dimension_numbers<[1], [1], [0], [0], [0, 0, 1, 0], [], []>} : vector<2x16xf32>, vector<16x16xf32>, vector<2x16xf32> -> vector<2x16xf32>
    %cst_35 = arith.constant 0.000000e+00 : f32
    %76 = vector.broadcast %cst_35 : f32 to vector<16x8xf32>
    %77 = vector.extract_strided_slice %74 {offsets = [0, 0], sizes = [16, 1], strides = [1, 1]} : vector<16x2xf32> to vector<16x1xf32>
    %78 = vector.extract_strided_slice %75 {offsets = [0, 0], sizes = [1, 16], strides = [1, 1]} : vector<2x16xf32> to vector<1x16xf32>
    %79 = vector.broadcast %77 : vector<16x1xf32> to vector<16x16xf32>
    %80 = vector.broadcast %78 : vector<1x16xf32> to vector<16x16xf32>
    %81 = arith.addf %79, %80 : vector<16x16xf32>
    %cst_36 = arith.constant 0.000000e+00 : f32
    %82 = vector.broadcast %cst_36 : f32 to vector<16x16xf32>
    %83 = arith.cmpf ogt, %81, %82 : vector<16x16xf32>
    %cst_37 = arith.constant 2.000000e-01 : f32
    %84 = vector.broadcast %cst_37 : f32 to vector<16x16xf32>
    %85 = arith.mulf %84, %81 : vector<16x16xf32>
    %86 = arith.select %83, %81, %85 : vector<16x16xi1>, vector<16x16xf32>
    %87 = arith.addf %86, %5 : vector<16x16xf32>
    %cst_38 = arith.constant dense<0xFF800000> : vector<16xf32>
    %88 = vector.multi_reduction <maximumf>, %87, %cst_38 [1] : vector<16x16xf32> to vector<16xf32>
    %89 = vector.shape_cast %88 : vector<16xf32> to vector<16x1xf32>
    %90 = vector.broadcast %89 : vector<16x1xf32> to vector<16x16xf32>
    %91 = arith.subf %87, %90 : vector<16x16xf32>
    %92 = math.exp %91 : vector<16x16xf32>
    %cst_39 = arith.constant dense<0.000000e+00> : vector<16xf32>
    %93 = vector.multi_reduction <add>, %92, %cst_39 [1] : vector<16x16xf32> to vector<16xf32>
    %94 = vector.shape_cast %93 : vector<16xf32> to vector<16x1xf32>
    %95 = vector.broadcast %94 : vector<16x1xf32> to vector<16x16xf32>
    %96 = arith.divf %92, %95 : vector<16x16xf32>
    %97 = vector.extract_strided_slice %73 {offsets = [0, 0], sizes = [16, 8], strides = [1, 1]} : vector<16x16xf32> to vector<16x8xf32>
    %cst_40 = arith.constant dense<0.000000e+00> : vector<16x8xf32>
    %98 = tpu.matmul %96, %97, %cst_40 {dimension_numbers = #tpu.dot_dimension_numbers<[1], [0], [0], [1], [0, 0, 1, 1], [], []>} : vector<16x16xf32>, vector<16x8xf32>, vector<16x8xf32> -> vector<16x8xf32>
    %99 = arith.addf %76, %98 : vector<16x8xf32>
    %100 = vector.extract_strided_slice %74 {offsets = [0, 1], sizes = [16, 1], strides = [1, 1]} : vector<16x2xf32> to vector<16x1xf32>
    %101 = vector.extract_strided_slice %75 {offsets = [1, 0], sizes = [1, 16], strides = [1, 1]} : vector<2x16xf32> to vector<1x16xf32>
    %102 = vector.broadcast %100 : vector<16x1xf32> to vector<16x16xf32>
    %103 = vector.broadcast %101 : vector<1x16xf32> to vector<16x16xf32>
    %104 = arith.addf %102, %103 : vector<16x16xf32>
    %cst_41 = arith.constant 0.000000e+00 : f32
    %105 = vector.broadcast %cst_41 : f32 to vector<16x16xf32>
    %106 = arith.cmpf ogt, %104, %105 : vector<16x16xf32>
    %cst_42 = arith.constant 2.000000e-01 : f32
    %107 = vector.broadcast %cst_42 : f32 to vector<16x16xf32>
    %108 = arith.mulf %107, %104 : vector<16x16xf32>
    %109 = arith.select %106, %104, %108 : vector<16x16xi1>, vector<16x16xf32>
    %110 = arith.addf %109, %5 : vector<16x16xf32>
    %cst_43 = arith.constant dense<0xFF800000> : vector<16xf32>
    %111 = vector.multi_reduction <maximumf>, %110, %cst_43 [1] : vector<16x16xf32> to vector<16xf32>
    %112 = vector.shape_cast %111 : vector<16xf32> to vector<16x1xf32>
    %113 = vector.broadcast %112 : vector<16x1xf32> to vector<16x16xf32>
    %114 = arith.subf %110, %113 : vector<16x16xf32>
    %115 = math.exp %114 : vector<16x16xf32>
    %cst_44 = arith.constant dense<0.000000e+00> : vector<16xf32>
    %116 = vector.multi_reduction <add>, %115, %cst_44 [1] : vector<16x16xf32> to vector<16xf32>
    %117 = vector.shape_cast %116 : vector<16xf32> to vector<16x1xf32>
    %118 = vector.broadcast %117 : vector<16x1xf32> to vector<16x16xf32>
    %119 = arith.divf %115, %118 : vector<16x16xf32>
    %120 = vector.extract_strided_slice %73 {offsets = [0, 8], sizes = [16, 8], strides = [1, 1]} : vector<16x16xf32> to vector<16x8xf32>
    %cst_45 = arith.constant dense<0.000000e+00> : vector<16x8xf32>
    %121 = tpu.matmul %119, %120, %cst_45 {dimension_numbers = #tpu.dot_dimension_numbers<[1], [0], [0], [1], [0, 0, 1, 1], [], []>} : vector<16x16xf32>, vector<16x8xf32>, vector<16x8xf32> -> vector<16x8xf32>
    %122 = arith.addf %99, %121 : vector<16x8xf32>
    %cst_46 = arith.constant 5.000000e-01 : f32
    %123 = vector.broadcast %cst_46 : f32 to vector<16x8xf32>
    %124 = arith.mulf %122, %123 : vector<16x8xf32>
    %125 = vector.broadcast %13 : vector<1x8xf32> to vector<16x8xf32>
    %126 = arith.addf %124, %125 : vector<16x8xf32>
    %127 = vector.broadcast %14 : vector<1x8xf32> to vector<16x8xf32>
    %128 = arith.mulf %126, %127 : vector<16x8xf32>
    %cst_47 = arith.constant dense<0.000000e+00> : vector<16xf32>
    %129 = vector.multi_reduction <add>, %128, %cst_47 [1] : vector<16x8xf32> to vector<16xf32>
    %130 = vector.shape_cast %129 : vector<16xf32> to vector<16x1xf32>
    %131 = vector.broadcast %15 : vector<1x1xf32> to vector<16x1xf32>
    %132 = arith.addf %130, %131 : vector<16x1xf32>
    %133 = arith.negf %132 : vector<16x1xf32>
    %134 = math.exp %133 : vector<16x1xf32>
    %cst_48 = arith.constant 1.000000e+00 : f32
    %135 = vector.broadcast %cst_48 : f32 to vector<16x1xf32>
    %136 = arith.addf %135, %134 : vector<16x1xf32>
    %137 = arith.divf %135, %136 : vector<16x1xf32>
    %138 = vector.broadcast %137 : vector<16x1xf32> to vector<16x8xf32>
    %139 = arith.mulf %126, %138 : vector<16x8xf32>
    %140 = vector.shape_cast %139 : vector<16x8xf32> to vector<2x8x8xf32>
    %cst_49 = arith.constant dense<0.000000e+00> : vector<2x8xf32>
    %141 = vector.multi_reduction <add>, %140, %cst_49 [1] : vector<2x8x8xf32> to vector<2x8xf32>
    %142 = vector.shape_cast %137 : vector<16x1xf32> to vector<2x8x1xf32>
    %cst_50 = arith.constant dense<0.000000e+00> : vector<2x1xf32>
    %143 = vector.multi_reduction <add>, %142, %cst_50 [1] : vector<2x8x1xf32> to vector<2x1xf32>
    %cst_51 = arith.constant 9.99999997E-7 : f32
    %144 = vector.broadcast %cst_51 : f32 to vector<2x1xf32>
    %145 = arith.maximumf %143, %144 : vector<2x1xf32>
    %146 = vector.broadcast %145 : vector<2x1xf32> to vector<2x8xf32>
    %147 = arith.divf %141, %146 : vector<2x8xf32>
    %c0_52 = arith.constant 0 : index
    %c0_53 = arith.constant 0 : index
    %148 = vector.load %arg3[%c0_52, %c0_53] : memref<2x8xf32, #tpu.memory_space<vmem>>, vector<2x8xf32>
    tpu.vector_store %arg3[%c0_52, %c0_53], %147 {strides = array<i32>} : memref<2x8xf32, #tpu.memory_space<vmem>>, vector<2x8xf32>,
    return
  }
}

</mosaic_0001>

<llo_original>
// kernel: tpu_custom_call.1
$region0: #{tpu_custom_call.1}
  #allocation0 [shape = 'u32[]', space=smem, size = 0x4, offset = 0x4, fixed_abs, tag = 'smem constant byte address 0x4 - core index']
  #allocation1 [shape = 'u32[144,128]{1,0:T(1,128)}', space=vmem, size = 0x12000, scoped, tag = 'internal scratch']
  %s0 = inlined_call_operand.vmem [shape: f32[16,8], index: 0, kind: input, shape index: {}]
  %s1 = inlined_call_operand.vmem [shape: f32[16,16], index: 1, kind: input, shape index: {}]
  %s2 = inlined_call_operand.vmem [shape: f32[64,32], index: 2, kind: input, shape index: {}]
  %s3 = inlined_call_operand.hbm [shape: f32[2,8], index: 3, kind: output, shape index: {}]
  %s4 = sld [smem:[#allocation0]]
  $region22: #{tpu_custom_call.1} parent=0
    _
  %s6 = ssub.s32 1, %s4
  %s7 = scalar_select 0, %s6, %s4
  $region1: #{tpu_custom_call.1} parent=0
    #allocation2 [shape = 'u8[1024]{0}', space=vmem, size = 0x400, scoped, tag = 'output window, operand 0, single buffered']
    #allocation3 [shape = 's32[1]{0}', space=sflag, size = 0x4, scoped, tag = 'scoped memory for tpu_custom_call.1']
    %8 = vsyncpa [#allocation3], 0
    // Predicated region
    $region2: #{tpu_custom_call.1} parent=1 // pred_check
      _
    $region3: #{tpu_custom_call.1} parent=1 // pred_check_branch
      %10 = sbr.rel (0) target = $region5
    $region4: #{tpu_custom_call.1} parent=1 // pred_region
      _
    $region5: #{tpu_custom_call.1} parent=1 // pred_fallthru
      _
    // Predicated region
    $region6: #{tpu_custom_call.1} parent=1 // pred_check
      _
    $region7: #{tpu_custom_call.1} parent=1 // pred_check_branch
      %12 = sbr.rel (0) target = $region9
    $region8: #{tpu_custom_call.1} parent=1 // pred_region
      _
    $region9: #{tpu_custom_call.1} parent=1 // pred_fallthru
      _
    // Predicated region
    $region10: #{tpu_custom_call.1} parent=1 // pred_check
      _
    $region11: #{tpu_custom_call.1} parent=1 // pred_check_branch
      %14 = sbr.rel (0) target = $region13
    $region12: #{tpu_custom_call.1} parent=1 // pred_region
      _
    $region13: #{tpu_custom_call.1} parent=1 // pred_fallthru
      _
    %v15 = vld [vmem:[%s1] sm:$0xff]
    %v16 = vld [vmem:[%s1 + $0x8] sm:$0xff]
    %vm17 = vcmp.gt.f32.partialorder %v15, 0.5
    %vm18 = vcmp.gt.f32.partialorder %v16, 0.5
    %v19 = vsel %vm17, 0.0, -1e+30
    %v20 = vsel %vm18, 0.0, -1e+30
    %v21 = vld [vmem:[%s2] sm:$0xff]
    %v22 = vld [vmem:[%s2 + $0x8] sm:$0x3]
    %v23 = vld [vmem:[%s2 + $0x10] sm:$0x3]
    %v24 = vld [vmem:[%s2 + $0x18] sm:$0xff]
    %v25 = vld [vmem:[%s2 + $0x20] sm:$0xff]
    %v26 = vld [vmem:[%s2 + $0x28] sm:$0x3]
    %v27 = vld [vmem:[%s2 + $0x30] sm:$0x3]
    %v28 = vld [vmem:[%s2 + $0x38] sm:$0x1]
    %v29 = vld [vmem:[%s2 + $0x39] sm:$0x1]
    %v30 = vld [vmem:[%s2 + $0x3a] sm:$0x1]
    %v31 = vld [vmem:[%s2 + $0x3b] sm:$0x1]
    %v32 = vld [vmem:[%s0] sm:$0xff]
    %v33 = vld [vmem:[%s0 + $0x8] sm:$0xff]
    %vm34 = vcmask 64512
    %v36 = vsel %vm34, %v32, 0
    %v39 = vsel %vm34, %v33, 0
    %41 = vmatprep.subr.mxu0 0.0
    %42 = vmatpush1.msra.mxu0 %v21
    %43 = vmatprep.subr.mxu0 0.0
    %44 = vmatpush1.msra.mxu0 0.0
    %45 = vmatprep.subr.mxu0 0.0
    %46 = vmatpush1.msra.mxu0 0.0
    %47 = vmatprep.subr.mxu0 0.0
    %48 = vmatpush1.msra.mxu0 0.0
    %49 = vmatprep.subr.mxu0 0.0
    %50 = vmatpush1.msra.mxu0 0.0
    %51 = vmatprep.subr.mxu0 0.0
    %52 = vmatpush1.msra.mxu0 0.0
    %53 = vmatprep.subr.mxu0 0.0
    %54 = vmatpush1.msra.mxu0 0.0
    %55 = vmatprep.subr.mxu0 0.0
    %56 = vmatpush1.msra.mxu0 0.0
    %57 = vmatprep.subr.mxu0 0.0
    %58 = vmatpush1.msra.mxu0 0.0
    %59 = vmatprep.subr.mxu0 0.0
    %60 = vmatpush1.msra.mxu0 0.0
    %61 = vmatprep.subr.mxu0 0.0
    %62 = vmatpush1.msra.mxu0 0.0
    %63 = vmatprep.subr.mxu0 0.0
    %64 = vmatpush1.msra.mxu0 0.0
    %65 = vmatprep.subr.mxu0 0.0
    %66 = vmatpush1.msra.mxu0 0.0
    %67 = vmatprep.subr.mxu0 0.0
    %68 = vmatpush1.msra.mxu0 0.0
    %69 = vmatprep.subr.mxu0 0.0
    %70 = vmatpush1.msra.mxu0 0.0
    %71 = vmatprep.subr.mxu0 0.0
    %72 = vmatpush1.msra.mxu0 0.0
    %73 = vmatprep.subr.mxu0 0.0
    %74 = vmatpush1.msra.mxu0 0.0
    %75 = vmatprep.subr.mxu0 0.0
    %76 = vmatpush1.msra.mxu0 0.0
    %77 = vmatprep.subr.mxu0 0.0
    %78 = vmatpush1.msra.mxu0 0.0
    %79 = vmatprep.subr.mxu0 0.0
    %80 = vmatpush1.msra.mxu0 0.0
    %81 = vmatprep.subr.mxu0 0.0
    %82 = vmatpush1.msra.mxu0 0.0
    %83 = vmatprep.subr.mxu0 0.0
    %84 = vmatpush1.msra.mxu0 0.0
    %85 = vmatprep.subr.mxu0 0.0
    %86 = vmatpush1.msra.mxu0 0.0
    %87 = vmatprep.subr.mxu0 0.0
    %88 = vmatpush1.msra.mxu0 0.0
    %89 = vmatprep.subr.mxu0 0.0
    %90 = vmatpush1.msra.mxu0 0.0
    %91 = vmatprep.subr.mxu0 0.0
    %92 = vmatpush1.msra.mxu0 0.0
    %93 = vmatprep.subr.mxu0 0.0
    %94 = vmatpush1.msra.mxu0 0.0
    %95 = vmatprep.subr.mxu0 0.0
    %96 = vmatpush1.msra.mxu0 0.0
    %97 = vmatprep.subr.mxu0 0.0
    %98 = vmatpush1.msra.mxu0 0.0
    %99 = vmatprep.subr.mxu0 0.0
    %100 = vmatpush1.msra.mxu0 0.0
    %101 = vmatprep.subr.mxu0 0.0
    %102 = vmatpush1.msra.mxu0 0.0
    %103 = vmatprep.subr.mxu0 0.0
    %104 = vmatpush1.msra.mxu0 0.0
    %105 = vmatprep.mubr.f32.mxu0 0.0
    %106 = vmatmul.mubr.f32.gmra.mrb[0].mxu0 %v36
    %v107 = vpop.f32.mrb[0].mxu0
    %v108 = vadd.f32 0.0, %v107
    %v109 = vpop.f32.mrb[0].mxu0
    %110 = vmatprep.mubr.f32.mxu0 0.0
    %111 = vmatmul.mubr.f32.gmra.mrb[0].mxu0 %v39
    %v112 = vpop.f32.mrb[0].mxu0
    %v113 = vadd.f32 0.0, %v112
    %v114 = vpop.f32.mrb[0].mxu0
    %115 = vdwg.mxu0
    %vm116 = vcmask 261120
    %v118 = vsel %vm116, %v108, 0
    %v121 = vsel %vm116, %v113, 0
    %v124 = vsel %vm116, %v22, 0
    %126 = vmatprep.subr.mxu0 0.0
    %127 = vmatpush1.xpose.msra.mxu0 %v124
    %128 = vmatprep.subr.mxu0 0.0
    %129 = vmatpush1.xpose.msra.mxu0 0.0
    %130 = vmatprep.subr.mxu0 0.0
    %131 = vmatpush1.xpose.msra.mxu0 0.0
    %132 = vmatprep.subr.mxu0 0.0
    %133 = vmatpush1.xpose.msra.mxu0 0.0
    %134 = vmatprep.subr.mxu0 0.0
    %135 = vmatpush1.xpose.msra.mxu0 0.0
    %136 = vmatprep.subr.mxu0 0.0
    %137 = vmatpush1.xpose.msra.mxu0 0.0
    %138 = vmatprep.subr.mxu0 0.0
    %139 = vmatpush1.xpose.msra.mxu0 0.0
    %140 = vmatprep.subr.mxu0 0.0
    %141 = vmatpush1.xpose.msra.mxu0 0.0
    %142 = vmatprep.subr.mxu0 0.0
    %143 = vmatpush1.xpose.msra.mxu0 0.0
    %144 = vmatprep.subr.mxu0 0.0
    %145 = vmatpush1.xpose.msra.mxu0 0.0
    %146 = vmatprep.subr.mxu0 0.0
    %147 = vmatpush1.xpose.msra.mxu0 0.0
    %148 = vmatprep.subr.mxu0 0.0
    %149 = vmatpush1.xpose.msra.mxu0 0.0
    %150 = vmatprep.subr.mxu0 0.0
    %151 = vmatpush1.xpose.msra.mxu0 0.0
    %152 = vmatprep.subr.mxu0 0.0
    %153 = vmatpush1.xpose.msra.mxu0 0.0
    %154 = vmatprep.subr.mxu0 0.0
    %155 = vmatpush1.xpose.msra.mxu0 0.0
    %156 = vmatprep.subr.mxu0 0.0
    %157 = vmatpush1.xpose.msra.mxu0 0.0
    %158 = vmatprep.subr.mxu0 0.0
    %159 = vmatpush1.xpose.msra.mxu0 0.0
    %160 = vmatprep.subr.mxu0 0.0
    %161 = vmatpush1.xpose.msra.mxu0 0.0
    %162 = vmatprep.subr.mxu0 0.0
    %163 = vmatpush1.xpose.msra.mxu0 0.0
    %164 = vmatprep.subr.mxu0 0.0
    %165 = vmatpush1.xpose.msra.mxu0 0.0
    %166 = vmatprep.subr.mxu0 0.0
    %167 = vmatpush1.xpose.msra.mxu0 0.0
    %168 = vmatprep.subr.mxu0 0.0
    %169 = vmatpush1.xpose.msra.mxu0 0.0
    %170 = vmatprep.subr.mxu0 0.0
    %171 = vmatpush1.xpose.msra.mxu0 0.0
    %172 = vmatprep.subr.mxu0 0.0
    %173 = vmatpush1.xpose.msra.mxu0 0.0
    %174 = vmatprep.subr.mxu0 0.0
    %175 = vmatpush1.xpose.msra.mxu0 0.0
    %176 = vmatprep.subr.mxu0 0.0
    %177 = vmatpush1.xpose.msra.mxu0 0.0
    %178 = vmatprep.subr.mxu0 0.0
    %179 = vmatpush1.xpose.msra.mxu0 0.0
    %180 = vmatprep.subr.mxu0 0.0
    %181 = vmatpush1.xpose.msra.mxu0 0.0
    %182 = vmatprep.subr.mxu0 0.0
    %183 = vmatpush1.xpose.msra.mxu0 0.0
    %184 = vmatprep.subr.mxu0 0.0
    %185 = vmatpush1.xpose.msra.mxu0 0.0
    %186 = vmatprep.subr.mxu0 0.0
    %187 = vmatpush1.xpose.msra.mxu0 0.0
    %188 = vmatprep.subr.mxu0 0.0
    %189 = vmatpush1.xpose.msra.mxu0 0.0
    %190 = vmatprep.mubr.f32.mxu0 0.0
    %191 = vmatmul.mubr.f32.gmra.mrb[0].mxu0 %v118
    %v192 = vpop.f32.mrb[0].mxu0
    %v193 = vadd.f32 0.0, %v192
    %v194 = vpop.f32.mrb[0].mxu0
    %195 = vmatprep.mubr.f32.mxu0 0.0
    %196 = vmatmul.mubr.f32.gmra.mrb[0].mxu0 %v121
    %v197 = vpop.f32.mrb[0].mxu0
    %v198 = vadd.f32 0.0, %v197
    %v199 = vpop.f32.mrb[0].mxu0
    %200 = vdwg.mxu0
    %v202 = vsel %vm116, %v23, 0
    %204 = vmatprep.subr.mxu0 0.0
    %205 = vmatpush1.xpose.msra.mxu0 %v118
    %206 = vmatprep.subr.mxu0 0.0
    %207 = vmatpush1.xpose.msra.mxu0 %v121
    %208 = vmatprep.subr.mxu0 0.0
    %209 = vmatpush1.xpose.msra.mxu0 0.0
    %210 = vmatprep.subr.mxu0 0.0
    %211 = vmatpush1.xpose.msra.mxu0 0.0
    %212 = vmatprep.subr.mxu0 0.0
    %213 = vmatpush1.xpose.msra.mxu0 0.0
    %214 = vmatprep.subr.mxu0 0.0
    %215 = vmatpush1.xpose.msra.mxu0 0.0
    %216 = vmatprep.subr.mxu0 0.0
    %217 = vmatpush1.xpose.msra.mxu0 0.0
    %218 = vmatprep.subr.mxu0 0.0
    %219 = vmatpush1.xpose.msra.mxu0 0.0
    %220 = vmatprep.subr.mxu0 0.0
    %221 = vmatpush1.xpose.msra.mxu0 0.0
    %222 = vmatprep.subr.mxu0 0.0
    %223 = vmatpush1.xpose.msra.mxu0 0.0
    %224 = vmatprep.subr.mxu0 0.0
    %225 = vmatpush1.xpose.msra.mxu0 0.0
    %226 = vmatprep.subr.mxu0 0.0
    %227 = vmatpush1.xpose.msra.mxu0 0.0
    %228 = vmatprep.subr.mxu0 0.0
    %229 = vmatpush1.xpose.msra.mxu0 0.0
    %230 = vmatprep.subr.mxu0 0.0
    %231 = vmatpush1.xpose.msra.mxu0 0.0
    %232 = vmatprep.subr.mxu0 0.0
    %233 = vmatpush1.xpose.msra.mxu0 0.0
    %234 = vmatprep.subr.mxu0 0.0
    %235 = vmatpush1.xpose.msra.mxu0 0.0
    %236 = vmatprep.subr.mxu0 0.0
    %237 = vmatpush1.xpose.msra.mxu0 0.0
    %238 = vmatprep.subr.mxu0 0.0
    %239 = vmatpush1.xpose.msra.mxu0 0.0
    %240 = vmatprep.subr.mxu0 0.0
    %241 = vmatpush1.xpose.msra.mxu0 0.0
    %242 = vmatprep.subr.mxu0 0.0
    %243 = vmatpush1.xpose.msra.mxu0 0.0
    %244 = vmatprep.subr.mxu0 0.0
    %245 = vmatpush1.xpose.msra.mxu0 0.0
    %246 = vmatprep.subr.mxu0 0.0
    %247 = vmatpush1.xpose.msra.mxu0 0.0
    %248 = vmatprep.subr.mxu0 0.0
    %249 = vmatpush1.xpose.msra.mxu0 0.0
    %250 = vmatprep.subr.mxu0 0.0
    %251 = vmatpush1.xpose.msra.mxu0 0.0
    %252 = vmatprep.subr.mxu0 0.0
    %253 = vmatpush1.xpose.msra.mxu0 0.0
    %254 = vmatprep.subr.mxu0 0.0
    %255 = vmatpush1.xpose.msra.mxu0 0.0
    %256 = vmatprep.subr.mxu0 0.0
    %257 = vmatpush1.xpose.msra.mxu0 0.0
    %258 = vmatprep.subr.mxu0 0.0
    %259 = vmatpush1.xpose.msra.mxu0 0.0
    %260 = vmatprep.subr.mxu0 0.0
    %261 = vmatpush1.xpose.msra.mxu0 0.0
    %262 = vmatprep.subr.mxu0 0.0
    %263 = vmatpush1.xpose.msra.mxu0 0.0
    %264 = vmatprep.subr.mxu0 0.0
    %265 = vmatpush1.xpose.msra.mxu0 0.0
    %266 = vmatprep.subr.mxu0 0.0
    %267 = vmatpush1.xpose.msra.mxu0 0.0
    %268 = vmatprep.mubr.f32.mxu0 0.0
    %269 = vmatmul.mubr.f32.gmra.mrb[0].mxu0 %v202
    %v270 = vpop.f32.mrb[0].mxu0
    %v271 = vadd.f32 0.0, %v270
    %v272 = vpop.f32.mrb[0].mxu0
    %273 = vdwg.mxu0
    %275 = vset.pattern.permute.xlu0 0
    %276 = vperm.xlu0 %275, %v193
    %v277 = vpop.permute.xlu0 %276
    %280 = vset.pattern.permute.xlu0 0
    %281 = vperm.xlu0 %280, %v198
    %v282 = vpop.permute.xlu0 %281
    %v284 = vlaneseq
    %v285 = vshrl.u32 %v284, 7
    %v286 = vsub.s32 0, %v285
    %v287 = vrot.slane %v271, %v286
    %v288 = vadd.f32 %v277, %v287
    %v289 = vadd.f32 %v282, %v287
    %vm290 = vcmp.gt.f32.partialorder %v288, 0.0
    %vm291 = vcmp.gt.f32.partialorder %v289, 0.0
    %v292 = vmul.f32 %v288, 0.2
    %v293 = vmul.f32 %v289, 0.2
    %v294 = vsel %vm290, %v288, %v292
    %v295 = vsel %vm291, %v289, %v293
    %v296 = vadd.f32 %v294, %v19
    %v297 = vadd.f32 %v295, %v20
    %vm298 = vcmask 130048
    %v299 = vsel %vm298, %v296, -inf
    %300 = vmax.xlane.f32.xlu0 %v299
    %v301 = vpop.xlane.xlu0 %300
    %v302 = vsel %vm298, %v297, -inf
    %303 = vmax.xlane.f32.xlu0 %v302
    %v304 = vpop.xlane.xlu0 %303
    %v305 = vsub.f32 %v296, %v301
    %v306 = vsub.f32 %v297, %v304
    %v307 = vmul.f32 %v305, 1.442695
    %v308 = vpow.pop %v307
    %v309 = vmul.f32 %v306, 1.442695
    %v310 = vpow.pop %v309
    %v311 = vsel %vm298, %v308, 0.0
    %312 = vadd.xlane.f32.xlu0 %v311
    %v313 = vpop.xlane.xlu0 %312
    %v314 = vsel %vm298, %v310, 0.0
    %315 = vadd.xlane.f32.xlu0 %v314
    %v316 = vpop.xlane.xlu0 %315
    %v317 = vrcp.pop %v313
    %v318 = vmul.f32 %v308, %v317
    %v319 = vrcp.pop %v316
    %v320 = vmul.f32 %v310, %v319
    %321 = vset.pattern.permute.xlu0 1
    %322 = vperm.xlu0 %321, %v193
    %v323 = vpop.permute.xlu0 %322
    %325 = vset.pattern.permute.xlu0 1
    %326 = vperm.xlu0 %325, %v198
    %v327 = vpop.permute.xlu0 %326
    %v329 = vlaneseq
    %v330 = vshrl.u32 %v329, 7
    %v331 = vsub.s32 1, %v330
    %v332 = vrot.slane %v271, %v331
    %v333 = vadd.f32 %v323, %v332
    %v334 = vadd.f32 %v327, %v332
    %vm335 = vcmp.gt.f32.partialorder %v333, 0.0
    %vm336 = vcmp.gt.f32.partialorder %v334, 0.0
    %v337 = vmul.f32 %v333, 0.2
    %v338 = vmul.f32 %v334, 0.2
    %v339 = vsel %vm335, %v333, %v337
    %v340 = vsel %vm336, %v334, %v338
    %v341 = vadd.f32 %v339, %v19
    %v342 = vadd.f32 %v340, %v20
    %v343 = vsel %vm298, %v341, -inf
    %344 = vmax.xlane.f32.xlu0 %v343
    %v345 = vpop.xlane.xlu0 %344
    %v346 = vsel %vm298, %v342, -inf
    %347 = vmax.xlane.f32.xlu0 %v346
    %v348 = vpop.xlane.xlu0 %347
    %v349 = vsub.f32 %v341, %v345
    %v350 = vsub.f32 %v342, %v348
    %v351 = vmul.f32 %v349, 1.442695
    %v352 = vpow.pop %v351
    %v353 = vmul.f32 %v350, 1.442695
    %v354 = vpow.pop %v353
    %v355 = vsel %vm298, %v352, 0.0
    %356 = vadd.xlane.f32.xlu0 %v355
    %v357 = vpop.xlane.xlu0 %356
    %v358 = vsel %vm298, %v354, 0.0
    %359 = vadd.xlane.f32.xlu0 %v358
    %v360 = vpop.xlane.xlu0 %359
    %v361 = vrcp.pop %v357
    %v362 = vmul.f32 %v352, %v361
    %v363 = vrcp.pop %v360
    %v364 = vmul.f32 %v354, %v363
    %365 = vrot.lane.b32.xlu0 %v108, 112
    %v366 = vpop.permute.xlu0 %365
    %367 = vrot.lane.b32.xlu0 %v113, 112
    %v368 = vpop.permute.xlu0 %367
    %v372 = vsel %vm298, %v362, 0
    %v375 = vsel %vm298, %v364, 0
    %377 = vmatprep.subr.mxu0 0.0
    %378 = vmatpush1.msra.mxu0 %v366
    %379 = vmatprep.subr.mxu0 0.0
    %380 = vmatpush1.msra.mxu0 %v368
    %381 = vmatprep.subr.mxu0 0.0
    %382 = vmatpush1.msra.mxu0 0.0
    %383 = vmatprep.subr.mxu0 0.0
    %384 = vmatpush1.msra.mxu0 0.0
    %385 = vmatprep.subr.mxu0 0.0
    %386 = vmatpush1.msra.mxu0 0.0
    %387 = vmatprep.subr.mxu0 0.0
    %388 = vmatpush1.msra.mxu0 0.0
    %389 = vmatprep.subr.mxu0 0.0
    %390 = vmatpush1.msra.mxu0 0.0
    %391 = vmatprep.subr.mxu0 0.0
    %392 = vmatpush1.msra.mxu0 0.0
    %393 = vmatprep.subr.mxu0 0.0
    %394 = vmatpush1.msra.mxu0 0.0
    %395 = vmatprep.subr.mxu0 0.0
    %396 = vmatpush1.msra.mxu0 0.0
    %397 = vmatprep.subr.mxu0 0.0
    %398 = vmatpush1.msra.mxu0 0.0
    %399 = vmatprep.subr.mxu0 0.0
    %400 = vmatpush1.msra.mxu0 0.0
    %401 = vmatprep.subr.mxu0 0.0
    %402 = vmatpush1.msra.mxu0 0.0
    %403 = vmatprep.subr.mxu0 0.0
    %404 = vmatpush1.msra.mxu0 0.0
    %405 = vmatprep.subr.mxu0 0.0
    %406 = vmatpush1.msra.mxu0 0.0
    %407 = vmatprep.subr.mxu0 0.0
    %408 = vmatpush1.msra.mxu0 0.0
    %409 = vmatprep.subr.mxu0 0.0
    %410 = vmatpush1.msra.mxu0 0.0
    %411 = vmatprep.subr.mxu0 0.0
    %412 = vmatpush1.msra.mxu0 0.0
    %413 = vmatprep.subr.mxu0 0.0
    %414 = vmatpush1.msra.mxu0 0.0
    %415 = vmatprep.subr.mxu0 0.0
    %416 = vmatpush1.msra.mxu0 0.0
    %417 = vmatprep.subr.mxu0 0.0
    %418 = vmatpush1.msra.mxu0 0.0
    %419 = vmatprep.subr.mxu0 0.0
    %420 = vmatpush1.msra.mxu0 0.0
    %421 = vmatprep.subr.mxu0 0.0
    %422 = vmatpush1.msra.mxu0 0.0
    %423 = vmatprep.subr.mxu0 0.0
    %424 = vmatpush1.msra.mxu0 0.0
    %425 = vmatprep.subr.mxu0 0.0
    %426 = vmatpush1.msra.mxu0 0.0
    %427 = vmatprep.subr.mxu0 0.0
    %428 = vmatpush1.msra.mxu0 0.0
    %429 = vmatprep.subr.mxu0 0.0
    %430 = vmatpush1.msra.mxu0 0.0
    %431 = vmatprep.subr.mxu0 0.0
    %432 = vmatpush1.msra.mxu0 0.0
    %433 = vmatprep.subr.mxu0 0.0
    %434 = vmatpush1.msra.mxu0 0.0
    %435 = vmatprep.subr.mxu0 0.0
    %436 = vmatpush1.msra.mxu0 0.0
    %437 = vmatprep.subr.mxu0 0.0
    %438 = vmatpush1.msra.mxu0 0.0
    %439 = vmatprep.subr.mxu0 0.0
    %440 = vmatpush1.msra.mxu0 0.0
    %441 = vmatprep.mubr.f32.mxu0 0.0
    %442 = vmatmul.mubr.f32.gmra.mrb[0].mxu0 %v372
    %v443 = vpop.f32.mrb[0].mxu0
    %v444 = vadd.f32 0.0, %v443
    %v445 = vpop.f32.mrb[0].mxu0
    %446 = vmatprep.mubr.f32.mxu0 0.0
    %447 = vmatmul.mubr.f32.gmra.mrb[0].mxu0 %v375
    %v448 = vpop.f32.mrb[0].mxu0
    %v449 = vadd.f32 0.0, %v448
    %v450 = vpop.f32.mrb[0].mxu0
    %451 = vdwg.mxu0
    %v453 = vsel %vm298, %v318, 0
    %v456 = vsel %vm298, %v320, 0
    %458 = vmatprep.subr.mxu0 0.0
    %459 = vmatpush1.msra.mxu0 %v108
    %460 = vmatprep.subr.mxu0 0.0
    %461 = vmatpush1.msra.mxu0 %v113
    %462 = vmatprep.subr.mxu0 0.0
    %463 = vmatpush1.msra.mxu0 0.0
    %464 = vmatprep.subr.mxu0 0.0
    %465 = vmatpush1.msra.mxu0 0.0
    %466 = vmatprep.subr.mxu0 0.0
    %467 = vmatpush1.msra.mxu0 0.0
    %468 = vmatprep.subr.mxu0 0.0
    %469 = vmatpush1.msra.mxu0 0.0
    %470 = vmatprep.subr.mxu0 0.0
    %471 = vmatpush1.msra.mxu0 0.0
    %472 = vmatprep.subr.mxu0 0.0
    %473 = vmatpush1.msra.mxu0 0.0
    %474 = vmatprep.subr.mxu0 0.0
    %475 = vmatpush1.msra.mxu0 0.0
    %476 = vmatprep.subr.mxu0 0.0
    %477 = vmatpush1.msra.mxu0 0.0
    %478 = vmatprep.subr.mxu0 0.0
    %479 = vmatpush1.msra.mxu0 0.0
    %480 = vmatprep.subr.mxu0 0.0
    %481 = vmatpush1.msra.mxu0 0.0
    %482 = vmatprep.subr.mxu0 0.0
    %483 = vmatpush1.msra.mxu0 0.0
    %484 = vmatprep.subr.mxu0 0.0
    %485 = vmatpush1.msra.mxu0 0.0
    %486 = vmatprep.subr.mxu0 0.0
    %487 = vmatpush1.msra.mxu0 0.0
    %488 = vmatprep.subr.mxu0 0.0
    %489 = vmatpush1.msra.mxu0 0.0
    %490 = vmatprep.subr.mxu0 0.0
    %491 = vmatpush1.msra.mxu0 0.0
    %492 = vmatprep.subr.mxu0 0.0
    %493 = vmatpush1.msra.mxu0 0.0
    %494 = vmatprep.subr.mxu0 0.0
    %495 = vmatpush1.msra.mxu0 0.0
    %496 = vmatprep.subr.mxu0 0.0
    %497 = vmatpush1.msra.mxu0 0.0
    %498 = vmatprep.subr.mxu0 0.0
    %499 = vmatpush1.msra.mxu0 0.0
    %500 = vmatprep.subr.mxu0 0.0
    %501 = vmatpush1.msra.mxu0 0.0
    %502 = vmatprep.subr.mxu0 0.0
    %503 = vmatpush1.msra.mxu0 0.0
    %504 = vmatprep.subr.mxu0 0.0
    %505 = vmatpush1.msra.mxu0 0.0
    %506 = vmatprep.subr.mxu0 0.0
    %507 = vmatpush1.msra.mxu0 0.0
    %508 = vmatprep.subr.mxu0 0.0
    %509 = vmatpush1.msra.mxu0 0.0
    %510 = vmatprep.subr.mxu0 0.0
    %511 = vmatpush1.msra.mxu0 0.0
    %512 = vmatprep.subr.mxu0 0.0
    %513 = vmatpush1.msra.mxu0 0.0
    %514 = vmatprep.subr.mxu0 0.0
    %515 = vmatpush1.msra.mxu0 0.0
    %516 = vmatprep.subr.mxu0 0.0
    %517 = vmatpush1.msra.mxu0 0.0
    %518 = vmatprep.subr.mxu0 0.0
    %519 = vmatpush1.msra.mxu0 0.0
    %520 = vmatprep.subr.mxu0 0.0
    %521 = vmatpush1.msra.mxu0 0.0
    %522 = vmatprep.mubr.f32.mxu0 0.0
    %523 = vmatmul.mubr.f32.gmra.mrb[0].mxu0 %v453
    %v524 = vpop.f32.mrb[0].mxu0
    %v525 = vadd.f32 %v444, %v524
    %v526 = vpop.f32.mrb[0].mxu0
    %527 = vmatprep.mubr.f32.mxu0 0.0
    %528 = vmatmul.mubr.f32.gmra.mrb[0].mxu0 %v456
    %v529 = vpop.f32.mrb[0].mxu0
    %v530 = vadd.f32 %v449, %v529
    %v531 = vpop.f32.mrb[0].mxu0
    %532 = vdwg.mxu0
    %v533 = vmul.f32 %v525, 0.5
    %v534 = vmul.f32 %v530, 0.5
    %v535 = vlaneseq
    %v536 = vshrl.u32 %v535, 7
    %v537 = vsub.s32 0, %v536
    %v538 = vrot.slane %v28, %v537
    %v539 = vadd.f32 %v533, %v538
    %v540 = vadd.f32 %v534, %v538
    %v541 = vmax.f32 %v539, 0.0
    %v542 = vmax.f32 %v540, 0.0
    %v544 = vsel %vm298, %v541, 0
    %v547 = vsel %vm298, %v542, 0
    %549 = vmatprep.subr.mxu0 0.0
    %550 = vmatpush1.msra.mxu0 %v24
    %551 = vmatprep.subr.mxu0 0.0
    %552 = vmatpush1.msra.mxu0 %v25
    %553 = vmatprep.subr.mxu0 0.0
    %554 = vmatpush1.msra.mxu0 0.0
    %555 = vmatprep.subr.mxu0 0.0
    %556 = vmatpush1.msra.mxu0 0.0
    %557 = vmatprep.subr.mxu0 0.0
    %558 = vmatpush1.msra.mxu0 0.0
    %559 = vmatprep.subr.mxu0 0.0
    %560 = vmatpush1.msra.mxu0 0.0
    %561 = vmatprep.subr.mxu0 0.0
    %562 = vmatpush1.msra.mxu0 0.0
    %563 = vmatprep.subr.mxu0 0.0
    %564 = vmatpush1.msra.mxu0 0.0
    %565 = vmatprep.subr.mxu0 0.0
    %566 = vmatpush1.msra.mxu0 0.0
    %567 = vmatprep.subr.mxu0 0.0
    %568 = vmatpush1.msra.mxu0 0.0
    %569 = vmatprep.subr.mxu0 0.0
    %570 = vmatpush1.msra.mxu0 0.0
    %571 = vmatprep.subr.mxu0 0.0
    %572 = vmatpush1.msra.mxu0 0.0
    %573 = vmatprep.subr.mxu0 0.0
    %574 = vmatpush1.msra.mxu0 0.0
    %575 = vmatprep.subr.mxu0 0.0
    %576 = vmatpush1.msra.mxu0 0.0
    %577 = vmatprep.subr.mxu0 0.0
    %578 = vmatpush1.msra.mxu0 0.0
    %579 = vmatprep.subr.mxu0 0.0
    %580 = vmatpush1.msra.mxu0 0.0
    %581 = vmatprep.subr.mxu0 0.0
    %582 = vmatpush1.msra.mxu0 0.0
    %583 = vmatprep.subr.mxu0 0.0
    %584 = vmatpush1.msra.mxu0 0.0
    %585 = vmatprep.subr.mxu0 0.0
    %586 = vmatpush1.msra.mxu0 0.0
    %587 = vmatprep.subr.mxu0 0.0
    %588 = vmatpush1.msra.mxu0 0.0
    %589 = vmatprep.subr.mxu0 0.0
    %590 = vmatpush1.msra.mxu0 0.0
    %591 = vmatprep.subr.mxu0 0.0
    %592 = vmatpush1.msra.mxu0 0.0
    %593 = vmatprep.subr.mxu0 0.0
    %594 = vmatpush1.msra.mxu0 0.0
    %595 = vmatprep.subr.mxu0 0.0
    %596 = vmatpush1.msra.mxu0 0.0
    %597 = vmatprep.subr.mxu0 0.0
    %598 = vmatpush1.msra.mxu0 0.0
    %599 = vmatprep.subr.mxu0 0.0
    %600 = vmatpush1.msra.mxu0 0.0
    %601 = vmatprep.subr.mxu0 0.0
    %602 = vmatpush1.msra.mxu0 0.0
    %603 = vmatprep.subr.mxu0 0.0
    %604 = vmatpush1.msra.mxu0 0.0
    %605 = vmatprep.subr.mxu0 0.0
    %606 = vmatpush1.msra.mxu0 0.0
    %607 = vmatprep.subr.mxu0 0.0
    %608 = vmatpush1.msra.mxu0 0.0
    %609 = vmatprep.subr.mxu0 0.0
    %610 = vmatpush1.msra.mxu0 0.0
    %611 = vmatprep.subr.mxu0 0.0
    %612 = vmatpush1.msra.mxu0 0.0
    %613 = vmatprep.mubr.f32.mxu0 0.0
    %614 = vmatmul.mubr.f32.gmra.mrb[0].mxu0 %v544
    %v615 = vpop.f32.mrb[0].mxu0
    %v616 = vadd.f32 0.0, %v615
    %v617 = vpop.f32.mrb[0].mxu0
    %618 = vmatprep.mubr.f32.mxu0 0.0
    %619 = vmatmul.mubr.f32.gmra.mrb[0].mxu0 %v547
    %v620 = vpop.f32.mrb[0].mxu0
    %v621 = vadd.f32 0.0, %v620
    %v622 = vpop.f32.mrb[0].mxu0
    %623 = vdwg.mxu0
    %v625 = vsel %vm298, %v616, 0
    %v628 = vsel %vm298, %v621, 0
    %v631 = vsel %vm298, %v26, 0
    %633 = vmatprep.subr.mxu0 0.0
    %634 = vmatpush1.xpose.msra.mxu0 %v631
    %635 = vmatprep.subr.mxu0 0.0
    %636 = vmatpush1.xpose.msra.mxu0 0.0
    %637 = vmatprep.subr.mxu0 0.0
    %638 = vmatpush1.xpose.msra.mxu0 0.0
    %639 = vmatprep.subr.mxu0 0.0
    %640 = vmatpush1.xpose.msra.mxu0 0.0
    %641 = vmatprep.subr.mxu0 0.0
    %642 = vmatpush1.xpose.msra.mxu0 0.0
    %643 = vmatprep.subr.mxu0 0.0
    %644 = vmatpush1.xpose.msra.mxu0 0.0
    %645 = vmatprep.subr.mxu0 0.0
    %646 = vmatpush1.xpose.msra.mxu0 0.0
    %647 = vmatprep.subr.mxu0 0.0
    %648 = vmatpush1.xpose.msra.mxu0 0.0
    %649 = vmatprep.subr.mxu0 0.0
    %650 = vmatpush1.xpose.msra.mxu0 0.0
    %651 = vmatprep.subr.mxu0 0.0
    %652 = vmatpush1.xpose.msra.mxu0 0.0
    %653 = vmatprep.subr.mxu0 0.0
    %654 = vmatpush1.xpose.msra.mxu0 0.0
    %655 = vmatprep.subr.mxu0 0.0
    %656 = vmatpush1.xpose.msra.mxu0 0.0
    %657 = vmatprep.subr.mxu0 0.0
    %658 = vmatpush1.xpose.msra.mxu0 0.0
    %659 = vmatprep.subr.mxu0 0.0
    %660 = vmatpush1.xpose.msra.mxu0 0.0
    %661 = vmatprep.subr.mxu0 0.0
    %662 = vmatpush1.xpose.msra.mxu0 0.0
    %663 = vmatprep.subr.mxu0 0.0
    %664 = vmatpush1.xpose.msra.mxu0 0.0
    %665 = vmatprep.subr.mxu0 0.0
    %666 = vmatpush1.xpose.msra.mxu0 0.0
    %667 = vmatprep.subr.mxu0 0.0
    %668 = vmatpush1.xpose.msra.mxu0 0.0
    %669 = vmatprep.subr.mxu0 0.0
    %670 = vmatpush1.xpose.msra.mxu0 0.0
    %671 = vmatprep.subr.mxu0 0.0
    %672 = vmatpush1.xpose.msra.mxu0 0.0
    %673 = vmatprep.subr.mxu0 0.0
    %674 = vmatpush1.xpose.msra.mxu0 0.0
    %675 = vmatprep.subr.mxu0 0.0
    %676 = vmatpush1.xpose.msra.mxu0 0.0
    %677 = vmatprep.subr.mxu0 0.0
    %678 = vmatpush1.xpose.msra.mxu0 0.0
    %679 = vmatprep.subr.mxu0 0.0
    %680 = vmatpush1.xpose.msra.mxu0 0.0
    %681 = vmatprep.subr.mxu0 0.0
    %682 = vmatpush1.xpose.msra.mxu0 0.0
    %683 = vmatprep.subr.mxu0 0.0
    %684 = vmatpush1.xpose.msra.mxu0 0.0
    %685 = vmatprep.subr.mxu0 0.0
    %686 = vmatpush1.xpose.msra.mxu0 0.0
    %687 = vmatprep.subr.mxu0 0.0
    %688 = vmatpush1.xpose.msra.mxu0 0.0
    %689 = vmatprep.subr.mxu0 0.0
    %690 = vmatpush1.xpose.msra.mxu0 0.0
    %691 = vmatprep.subr.mxu0 0.0
    %692 = vmatpush1.xpose.msra.mxu0 0.0
    %693 = vmatprep.subr.mxu0 0.0
    %694 = vmatpush1.xpose.msra.mxu0 0.0
    %695 = vmatprep.subr.mxu0 0.0
    %696 = vmatpush1.xpose.msra.mxu0 0.0
    %697 = vmatprep.mubr.f32.mxu0 0.0
    %698 = vmatmul.mubr.f32.gmra.mrb[0].mxu0 %v625
    %v699 = vpop.f32.mrb[0].mxu0
    %v700 = vadd.f32 0.0, %v699
    %v701 = vpop.f32.mrb[0].mxu0
    %702 = vmatprep.mubr.f32.mxu0 0.0
    %703 = vmatmul.mubr.f32.gmra.mrb[0].mxu0 %v628
    %v704 = vpop.f32.mrb[0].mxu0
    %v705 = vadd.f32 0.0, %v704
    %v706 = vpop.f32.mrb[0].mxu0
    %707 = vdwg.mxu0
    %v709 = vsel %vm298, %v27, 0
    %711 = vmatprep.subr.mxu0 0.0
    %712 = vmatpush1.xpose.msra.mxu0 %v625
    %713 = vmatprep.subr.mxu0 0.0
    %714 = vmatpush1.xpose.msra.mxu0 %v628
    %715 = vmatprep.subr.mxu0 0.0
    %716 = vmatpush1.xpose.msra.mxu0 0.0
    %717 = vmatprep.subr.mxu0 0.0
    %718 = vmatpush1.xpose.msra.mxu0 0.0
    %719 = vmatprep.subr.mxu0 0.0
    %720 = vmatpush1.xpose.msra.mxu0 0.0
    %721 = vmatprep.subr.mxu0 0.0
    %722 = vmatpush1.xpose.msra.mxu0 0.0
    %723 = vmatprep.subr.mxu0 0.0
    %724 = vmatpush1.xpose.msra.mxu0 0.0
    %725 = vmatprep.subr.mxu0 0.0
    %726 = vmatpush1.xpose.msra.mxu0 0.0
    %727 = vmatprep.subr.mxu0 0.0
    %728 = vmatpush1.xpose.msra.mxu0 0.0
    %729 = vmatprep.subr.mxu0 0.0
    %730 = vmatpush1.xpose.msra.mxu0 0.0
    %731 = vmatprep.subr.mxu0 0.0
    %732 = vmatpush1.xpose.msra.mxu0 0.0
    %733 = vmatprep.subr.mxu0 0.0
    %734 = vmatpush1.xpose.msra.mxu0 0.0
    %735 = vmatprep.subr.mxu0 0.0
    %736 = vmatpush1.xpose.msra.mxu0 0.0
    %737 = vmatprep.subr.mxu0 0.0
    %738 = vmatpush1.xpose.msra.mxu0 0.0
    %739 = vmatprep.subr.mxu0 0.0
    %740 = vmatpush1.xpose.msra.mxu0 0.0
    %741 = vmatprep.subr.mxu0 0.0
    %742 = vmatpush1.xpose.msra.mxu0 0.0
    %743 = vmatprep.subr.mxu0 0.0
    %744 = vmatpush1.xpose.msra.mxu0 0.0
    %745 = vmatprep.subr.mxu0 0.0
    %746 = vmatpush1.xpose.msra.mxu0 0.0
    %747 = vmatprep.subr.mxu0 0.0
    %748 = vmatpush1.xpose.msra.mxu0 0.0
    %749 = vmatprep.subr.mxu0 0.0
    %750 = vmatpush1.xpose.msra.mxu0 0.0
    %751 = vmatprep.subr.mxu0 0.0
    %752 = vmatpush1.xpose.msra.mxu0 0.0
    %753 = vmatprep.subr.mxu0 0.0
    %754 = vmatpush1.xpose.msra.mxu0 0.0
    %755 = vmatprep.subr.mxu0 0.0
    %756 = vmatpush1.xpose.msra.mxu0 0.0
    %757 = vmatprep.subr.mxu0 0.0
    %758 = vmatpush1.xpose.msra.mxu0 0.0
    %759 = vmatprep.subr.mxu0 0.0
    %760 = vmatpush1.xpose.msra.mxu0 0.0
    %761 = vmatprep.subr.mxu0 0.0
    %762 = vmatpush1.xpose.msra.mxu0 0.0
    %763 = vmatprep.subr.mxu0 0.0
    %764 = vmatpush1.xpose.msra.mxu0 0.0
    %765 = vmatprep.subr.mxu0 0.0
    %766 = vmatpush1.xpose.msra.mxu0 0.0
    %767 = vmatprep.subr.mxu0 0.0
    %768 = vmatpush1.xpose.msra.mxu0 0.0
    %769 = vmatprep.subr.mxu0 0.0
    %770 = vmatpush1.xpose.msra.mxu0 0.0
    %771 = vmatprep.subr.mxu0 0.0
    %772 = vmatpush1.xpose.msra.mxu0 0.0
    %773 = vmatprep.subr.mxu0 0.0
    %774 = vmatpush1.xpose.msra.mxu0 0.0
    %775 = vmatprep.mubr.f32.mxu0 0.0
    %776 = vmatmul.mubr.f32.gmra.mrb[0].mxu0 %v709
    %v777 = vpop.f32.mrb[0].mxu0
    %v778 = vadd.f32 0.0, %v777
    %v779 = vpop.f32.mrb[0].mxu0
    %780 = vdwg.mxu0
    %782 = vset.pattern.permute.xlu0 0
    %783 = vperm.xlu0 %782, %v700
    %v784 = vpop.permute.xlu0 %783
    %787 = vset.pattern.permute.xlu0 0
    %788 = vperm.xlu0 %787, %v705
    %v789 = vpop.permute.xlu0 %788
    %v791 = vlaneseq
    %v792 = vshrl.u32 %v791, 7
    %v793 = vsub.s32 0, %v792
    %v794 = vrot.slane %v778, %v793
    %v795 = vadd.f32 %v784, %v794
    %v796 = vadd.f32 %v789, %v794
    %vm797 = vcmp.gt.f32.partialorder %v795, 0.0
    %vm798 = vcmp.gt.f32.partialorder %v796, 0.0
    %v799 = vmul.f32 %v795, 0.2
    %v800 = vmul.f32 %v796, 0.2
    %v801 = vsel %vm797, %v795, %v799
    %v802 = vsel %vm798, %v796, %v800
    %v803 = vadd.f32 %v801, %v19
    %v804 = vadd.f32 %v802, %v20
    %v805 = vsel %vm298, %v803, -inf
    %806 = vmax.xlane.f32.xlu0 %v805
    %v807 = vpop.xlane.xlu0 %806
    %v808 = vsel %vm298, %v804, -inf
    %809 = vmax.xlane.f32.xlu0 %v808
    %v810 = vpop.xlane.xlu0 %809
    %v811 = vsub.f32 %v803, %v807
    %v812 = vsub.f32 %v804, %v810
    %v813 = vmul.f32 %v811, 1.442695
    %v814 = vpow.pop %v813
    %v815 = vmul.f32 %v812, 1.442695
    %v816 = vpow.pop %v815
    %v817 = vsel %vm298, %v814, 0.0
    %818 = vadd.xlane.f32.xlu0 %v817
    %v819 = vpop.xlane.xlu0 %818
    %v820 = vsel %vm298, %v816, 0.0
    %821 = vadd.xlane.f32.xlu0 %v820
    %v822 = vpop.xlane.xlu0 %821
    %v823 = vrcp.pop %v819
    %v824 = vmul.f32 %v814, %v823
    %v825 = vrcp.pop %v822
    %v826 = vmul.f32 %v816, %v825
    %827 = vset.pattern.permute.xlu0 1
    %828 = vperm.xlu0 %827, %v700
    %v829 = vpop.permute.xlu0 %828
    %831 = vset.pattern.permute.xlu0 1
    %832 = vperm.xlu0 %831, %v705
    %v833 = vpop.permute.xlu0 %832
    %v835 = vlaneseq
    %v836 = vshrl.u32 %v835, 7
    %v837 = vsub.s32 1, %v836
    %v838 = vrot.slane %v778, %v837
    %v839 = vadd.f32 %v829, %v838
    %v840 = vadd.f32 %v833, %v838
    %vm841 = vcmp.gt.f32.partialorder %v839, 0.0
    %vm842 = vcmp.gt.f32.partialorder %v840, 0.0
    %v843 = vmul.f32 %v839, 0.2
    %v844 = vmul.f32 %v840, 0.2
    %v845 = vsel %vm841, %v839, %v843
    %v846 = vsel %vm842, %v840, %v844
    %v847 = vadd.f32 %v845, %v19
    %v848 = vadd.f32 %v846, %v20
    %v849 = vsel %vm298, %v847, -inf
    %850 = vmax.xlane.f32.xlu0 %v849
    %v851 = vpop.xlane.xlu0 %850
    %v852 = vsel %vm298, %v848, -inf
    %853 = vmax.xlane.f32.xlu0 %v852
    %v854 = vpop.xlane.xlu0 %853
    %v855 = vsub.f32 %v847, %v851
    %v856 = vsub.f32 %v848, %v854
    %v857 = vmul.f32 %v855, 1.442695
    %v858 = vpow.pop %v857
    %v859 = vmul.f32 %v856, 1.442695
    %v860 = vpow.pop %v859
    %v861 = vsel %vm298, %v858, 0.0
    %862 = vadd.xlane.f32.xlu0 %v861
    %v863 = vpop.xlane.xlu0 %862
    %v864 = vsel %vm298, %v860, 0.0
    %865 = vadd.xlane.f32.xlu0 %v864
    %v866 = vpop.xlane.xlu0 %865
    %v867 = vrcp.pop %v863
    %v868 = vmul.f32 %v858, %v867
    %v869 = vrcp.pop %v866
    %v870 = vmul.f32 %v860, %v869
    %871 = vrot.lane.b32.xlu0 %v616, 120
    %v872 = vpop.permute.xlu0 %871
    %873 = vrot.lane.b32.xlu0 %v621, 120
    %v874 = vpop.permute.xlu0 %873
    %v878 = vsel %vm298, %v868, 0
    %v881 = vsel %vm298, %v870, 0
    %883 = vmatprep.subr.mxu0 0.0
    %884 = vmatpush1.msra.mxu0 %v872
    %885 = vmatprep.subr.mxu0 0.0
    %886 = vmatpush1.msra.mxu0 %v874
    %887 = vmatprep.subr.mxu0 0.0
    %888 = vmatpush1.msra.mxu0 0.0
    %889 = vmatprep.subr.mxu0 0.0
    %890 = vmatpush1.msra.mxu0 0.0
    %891 = vmatprep.subr.mxu0 0.0
    %892 = vmatpush1.msra.mxu0 0.0
    %893 = vmatprep.subr.mxu0 0.0
    %894 = vmatpush1.msra.mxu0 0.0
    %895 = vmatprep.subr.mxu0 0.0
    %896 = vmatpush1.msra.mxu0 0.0
    %897 = vmatprep.subr.mxu0 0.0
    %898 = vmatpush1.msra.mxu0 0.0
    %899 = vmatprep.subr.mxu0 0.0
    %900 = vmatpush1.msra.mxu0 0.0
    %901 = vmatprep.subr.mxu0 0.0
    %902 = vmatpush1.msra.mxu0 0.0
    %903 = vmatprep.subr.mxu0 0.0
    %904 = vmatpush1.msra.mxu0 0.0
    %905 = vmatprep.subr.mxu0 0.0
    %906 = vmatpush1.msra.mxu0 0.0
    %907 = vmatprep.subr.mxu0 0.0
    %908 = vmatpush1.msra.mxu0 0.0
    %909 = vmatprep.subr.mxu0 0.0
    %910 = vmatpush1.msra.mxu0 0.0
    %911 = vmatprep.subr.mxu0 0.0
    %912 = vmatpush1.msra.mxu0 0.0
    %913 = vmatprep.subr.mxu0 0.0
    %914 = vmatpush1.msra.mxu0 0.0
    %915 = vmatprep.subr.mxu0 0.0
    %916 = vmatpush1.msra.mxu0 0.0
    %917 = vmatprep.subr.mxu0 0.0
    %918 = vmatpush1.msra.mxu0 0.0
    %919 = vmatprep.subr.mxu0 0.0
    %920 = vmatpush1.msra.mxu0 0.0
    %921 = vmatprep.subr.mxu0 0.0
    %922 = vmatpush1.msra.mxu0 0.0
    %923 = vmatprep.subr.mxu0 0.0
    %924 = vmatpush1.msra.mxu0 0.0
    %925 = vmatprep.subr.mxu0 0.0
    %926 = vmatpush1.msra.mxu0 0.0
    %927 = vmatprep.subr.mxu0 0.0
    %928 = vmatpush1.msra.mxu0 0.0
    %929 = vmatprep.subr.mxu0 0.0
    %930 = vmatpush1.msra.mxu0 0.0
    %931 = vmatprep.subr.mxu0 0.0
    %932 = vmatpush1.msra.mxu0 0.0
    %933 = vmatprep.subr.mxu0 0.0
    %934 = vmatpush1.msra.mxu0 0.0
    %935 = vmatprep.subr.mxu0 0.0
    %936 = vmatpush1.msra.mxu0 0.0
    %937 = vmatprep.subr.mxu0 0.0
    %938 = vmatpush1.msra.mxu0 0.0
    %939 = vmatprep.subr.mxu0 0.0
    %940 = vmatpush1.msra.mxu0 0.0
    %941 = vmatprep.subr.mxu0 0.0
    %942 = vmatpush1.msra.mxu0 0.0
    %943 = vmatprep.subr.mxu0 0.0
    %944 = vmatpush1.msra.mxu0 0.0
    %945 = vmatprep.subr.mxu0 0.0
    %946 = vmatpush1.msra.mxu0 0.0
    %947 = vmatprep.mubr.f32.mxu0 0.0
    %948 = vmatmul.mubr.f32.gmra.mrb[0].mxu0 %v878
    %v949 = vpop.f32.mrb[0].mxu0
    %v950 = vadd.f32 0.0, %v949
    %v951 = vpop.f32.mrb[0].mxu0
    %952 = vmatprep.mubr.f32.mxu0 0.0
    %953 = vmatmul.mubr.f32.gmra.mrb[0].mxu0 %v881
    %v954 = vpop.f32.mrb[0].mxu0
    %v955 = vadd.f32 0.0, %v954
    %v956 = vpop.f32.mrb[0].mxu0
    %957 = vdwg.mxu0
    %v959 = vsel %vm298, %v824, 0
    %v962 = vsel %vm298, %v826, 0
    %964 = vmatprep.subr.mxu0 0.0
    %965 = vmatpush1.msra.mxu0 %v616
    %966 = vmatprep.subr.mxu0 0.0
    %967 = vmatpush1.msra.mxu0 %v621
    %968 = vmatprep.subr.mxu0 0.0
    %969 = vmatpush1.msra.mxu0 0.0
    %970 = vmatprep.subr.mxu0 0.0
    %971 = vmatpush1.msra.mxu0 0.0
    %972 = vmatprep.subr.mxu0 0.0
    %973 = vmatpush1.msra.mxu0 0.0
    %974 = vmatprep.subr.mxu0 0.0
    %975 = vmatpush1.msra.mxu0 0.0
    %976 = vmatprep.subr.mxu0 0.0
    %977 = vmatpush1.msra.mxu0 0.0
    %978 = vmatprep.subr.mxu0 0.0
    %979 = vmatpush1.msra.mxu0 0.0
    %980 = vmatprep.subr.mxu0 0.0
    %981 = vmatpush1.msra.mxu0 0.0
    %982 = vmatprep.subr.mxu0 0.0
    %983 = vmatpush1.msra.mxu0 0.0
    %984 = vmatprep.subr.mxu0 0.0
    %985 = vmatpush1.msra.mxu0 0.0
    %986 = vmatprep.subr.mxu0 0.0
    %987 = vmatpush1.msra.mxu0 0.0
    %988 = vmatprep.subr.mxu0 0.0
    %989 = vmatpush1.msra.mxu0 0.0
    %990 = vmatprep.subr.mxu0 0.0
    %991 = vmatpush1.msra.mxu0 0.0
    %992 = vmatprep.subr.mxu0 0.0
    %993 = vmatpush1.msra.mxu0 0.0
    %994 = vmatprep.subr.mxu0 0.0
    %995 = vmatpush1.msra.mxu0 0.0
    %996 = vmatprep.subr.mxu0 0.0
    %997 = vmatpush1.msra.mxu0 0.0
    %998 = vmatprep.subr.mxu0 0.0
    %999 = vmatpush1.msra.mxu0 0.0
    %1000 = vmatprep.subr.mxu0 0.0
    %1001 = vmatpush1.msra.mxu0 0.0
    %1002 = vmatprep.subr.mxu0 0.0
    %1003 = vmatpush1.msra.mxu0 0.0
    %1004 = vmatprep.subr.mxu0 0.0
    %1005 = vmatpush1.msra.mxu0 0.0
    %1006 = vmatprep.subr.mxu0 0.0
    %1007 = vmatpush1.msra.mxu0 0.0
    %1008 = vmatprep.subr.mxu0 0.0
    %1009 = vmatpush1.msra.mxu0 0.0
    %1010 = vmatprep.subr.mxu0 0.0
    %1011 = vmatpush1.msra.mxu0 0.0
    %1012 = vmatprep.subr.mxu0 0.0
    %1013 = vmatpush1.msra.mxu0 0.0
    %1014 = vmatprep.subr.mxu0 0.0
    %1015 = vmatpush1.msra.mxu0 0.0
    %1016 = vmatprep.subr.mxu0 0.0
    %1017 = vmatpush1.msra.mxu0 0.0
    %1018 = vmatprep.subr.mxu0 0.0
    %1019 = vmatpush1.msra.mxu0 0.0
    %1020 = vmatprep.subr.mxu0 0.0
    %1021 = vmatpush1.msra.mxu0 0.0
    %1022 = vmatprep.subr.mxu0 0.0
    %1023 = vmatpush1.msra.mxu0 0.0
    %1024 = vmatprep.subr.mxu0 0.0
    %1025 = vmatpush1.msra.mxu0 0.0
    %1026 = vmatprep.subr.mxu0 0.0
    %1027 = vmatpush1.msra.mxu0 0.0
    %1028 = vmatprep.mubr.f32.mxu0 0.0
    %1029 = vmatmul.mubr.f32.gmra.mrb[0].mxu0 %v959
    %v1030 = vpop.f32.mrb[0].mxu0
    %v1031 = vadd.f32 %v950, %v1030
    %v1032 = vpop.f32.mrb[0].mxu0
    %1033 = vmatprep.mubr.f32.mxu0 0.0
    %1034 = vmatmul.mubr.f32.gmra.mrb[0].mxu0 %v962
    %v1035 = vpop.f32.mrb[0].mxu0
    %v1036 = vadd.f32 %v955, %v1035
    %v1037 = vpop.f32.mrb[0].mxu0
    %1038 = vdwg.mxu0
    %v1039 = vmul.f32 %v1031, 0.5
    %v1040 = vmul.f32 %v1036, 0.5
    %v1041 = vlaneseq
    %v1042 = vshrl.u32 %v1041, 7
    %v1043 = vsub.s32 0, %v1042
    %v1044 = vrot.slane %v29, %v1043
    %v1045 = vadd.f32 %v1039, %v1044
    %v1046 = vadd.f32 %v1040, %v1044
    %v1047 = vlaneseq
    %v1048 = vshrl.u32 %v1047, 7
    %v1049 = vsub.s32 0, %v1048
    %v1050 = vrot.slane %v30, %v1049
    %v1051 = vmul.f32 %v1045, %v1050
    %v1052 = vmul.f32 %v1046, %v1050
    %v1053 = vsel %vm34, %v1051, 0.0
    %1054 = vadd.xlane.f32.xlu0 %v1053
    %v1055 = vpop.xlane.xlu0 %1054
    %v1056 = vsel %vm34, %v1052, 0.0
    %1057 = vadd.xlane.f32.xlu0 %v1056
    %v1058 = vpop.xlane.xlu0 %1057
    %v1059 = vlaneseq
    %v1060 = vshrl.u32 %v1059, 7
    %v1061 = vsub.s32 0, %v1060
    %v1062 = vrot.slane %v31, %v1061
    %v1063 = vadd.f32 %v1055, %v1062
    %v1064 = vadd.f32 %v1058, %v1062
    %v1065 = vxor.u32 %v1063, 2147483648
    %v1066 = vxor.u32 %v1064, 2147483648
    %v1067 = vmul.f32 %v1065, 1.442695
    %v1068 = vpow.pop %v1067
    %v1069 = vmul.f32 %v1066, 1.442695
    %v1070 = vpow.pop %v1069
    %v1071 = vadd.f32 %v1068, 1.0
    %v1072 = vadd.f32 %v1070, 1.0
    %v1073 = vrcp.pop %v1071
    %v1074 = vmul.f32 1.0, %v1073
    %v1075 = vrcp.pop %v1072
    %v1076 = vmul.f32 1.0, %v1075
    %1078 = vset.pattern.permute.xlu0 0
    %1079 = vperm.xlu0 %1078, %v1074
    %v1080 = vpop.permute.xlu0 %1079
    %1083 = vset.pattern.permute.xlu0 0
    %1084 = vperm.xlu0 %1083, %v1076
    %v1085 = vpop.permute.xlu0 %1084
    %v1087 = vmul.f32 %v1045, %v1080
    %v1088 = vmul.f32 %v1046, %v1085
    %v1089 = vsel %vm34, %v1087, 0.0
    %v1090 = vrot.slane %v1089, 4
    %v1091 = vadd.f32 %v1089, %v1090
    %v1092 = vrot.slane %v1091, 2
    %v1093 = vadd.f32 %v1091, %v1092
    %v1094 = vrot.slane %v1093, 1
    %v1095 = vadd.f32 %v1093, %v1094
    %v1096 = vsel %vm34, %v1088, 0.0
    %v1097 = vrot.slane %v1096, 4
    %v1098 = vadd.f32 %v1096, %v1097
    %v1099 = vrot.slane %v1098, 2
    %v1100 = vadd.f32 %v1098, %v1099
    %v1101 = vrot.slane %v1100, 1
    %v1102 = vadd.f32 %v1100, %v1101
    %vm1103 = vcmask 7168
    %v1104 = vsel %vm1103, %v1074, 0.0
    %v1105 = vrot.slane %v1104, 4
    %v1106 = vadd.f32 %v1104, %v1105
    %v1107 = vrot.slane %v1106, 2
    %v1108 = vadd.f32 %v1106, %v1107
    %v1109 = vrot.slane %v1108, 1
    %v1110 = vadd.f32 %v1108, %v1109
    %v1111 = vsel %vm1103, %v1076, 0.0
    %v1112 = vrot.slane %v1111, 4
    %v1113 = vadd.f32 %v1111, %v1112
    %v1114 = vrot.slane %v1113, 2
    %v1115 = vadd.f32 %v1113, %v1114
    %v1116 = vrot.slane %v1115, 1
    %v1117 = vadd.f32 %v1115, %v1116
    %v1118 = vmax.f32 %v1110, 1e-06
    %v1119 = vmax.f32 %v1117, 1e-06
    %1121 = vset.pattern.permute.xlu0 0
    %1122 = vperm.xlu0 %1121, %v1118
    %v1123 = vpop.permute.xlu0 %1122
    %1126 = vset.pattern.permute.xlu0 0
    %1127 = vperm.xlu0 %1126, %v1119
    %v1128 = vpop.permute.xlu0 %1127
    %v1130 = vrcp.pop %v1123
    %v1131 = vmul.f32 %v1095, %v1130
    %v1132 = vrcp.pop %v1128
    %v1133 = vmul.f32 %v1102, %v1132
    %vm1136 = vcmask 1041409
    %v1137 = vsel %vm1136, %v1133, %v1131
    %vm1139 = vcmask 58368
    %1140 = vst.msk [vmem:[#allocation2] sm:$0x3] %vm1139, %v1137
    // Predicated region
    $region14: #{tpu_custom_call.1} parent=1 // pred_check
      _
    $region15: #{tpu_custom_call.1} parent=1 // pred_check_branch
      %1142 = sbr.rel (0) target = $region17
    $region16: #{tpu_custom_call.1} parent=1 // pred_region
      %s1144 = ssub.s32 32, 32
      %1145 = vsyncadd [#allocation3], %s1144
      %s1147 = sshll.u32 [#allocation2], 4
      %s1148 = int_to_ptr.vmem [resolvable:$true] %s1147
      %1150 = dma.vmem_to_hbm [thread:$0]  %s1148, 32, %s3, [#allocation3]
    $region17: #{tpu_custom_call.1} parent=1 // pred_fallthru
      _
    // Predicated region
    $region18: #{tpu_custom_call.1} parent=1 // pred_check
      _
    $region19: #{tpu_custom_call.1} parent=1 // pred_check_branch
      %1152 = sbr.rel (0) target = $region21
    $region20: #{tpu_custom_call.1} parent=1 // pred_region
      %1153 = dma.done [#allocation3], 32
    $region21: #{tpu_custom_call.1} parent=1 // pred_fallthru
      _
    %1154 = vsyncpa [#allocation3], 1

</llo_original>
